<compile_context>
chip_gen: v7x
topology: tpu7x:2x2x1
jax: 0.10.0
libtpu: 0.0.40
codegen_flags: <defaults>
</compile_context>

<pallas_src>
import jax
import jax.numpy as jnp
from jax.experimental import pallas as pl
from jax.experimental.pallas import tpu as pltpu


def _softmax_last(x):
    m = jnp.max(x, axis=-1, keepdims=True)
    e = jnp.exp(x - m)
    return e / jnp.sum(e, axis=-1, keepdims=True)


# ---------------- kernels (one grid step == one batch tile of TB rows) ----------------

def _dot_general_kernel(q_ref, enc_ref, o_ref):
    """Shared by 'dot' (q = hidden) and 'general' (q = hidden @ W, computed in wrapper)."""
    enc = enc_ref[...].astype(jnp.float32)                 # (S, TB, H)
    enc_bt = pltpu.einshape("sbh->bsh", enc)               # (TB, S, H)  batch-major in VMEM
    q = q_ref[...].astype(jnp.float32)                     # (TB, H)
    # score[b, s] = sum_h q[b, h] * enc[s, b, h]   (VPU multiply + lane reduce; no M=1 MXU push)
    scores = jnp.sum(enc_bt * q[:, None, :], axis=-1)      # (TB, S)
    o_ref[...] = _softmax_last(scores).astype(o_ref.dtype)


def _concat_kernel(hp_ref, enc_ref, wet_ref, v_ref, o_ref):
    S, TB, H = enc_ref.shape
    enc = enc_ref[...].astype(jnp.float32)                 # (S, TB, H)
    enc_bt = pltpu.einshape("sbh->bsh", enc)               # (TB, S, H)
    hp = hp_ref[...].astype(jnp.float32)                   # (TB, H)  = hid @ W_h.T + bias (wrapper)
    wet = wet_ref[...].astype(jnp.float32)                 # (H, H)   = W[:, H:].T (resident)
    v = v_ref[...].astype(jnp.float32)                     # (1, H)   (resident)
    # One big matmul: flatten batch x seq so the MXU gets M = TB*S rows.
    ep = jnp.dot(enc_bt.reshape(TB * S, H), wet,
                 preferred_element_type=jnp.float32).reshape(TB, S, H)
    energy = jnp.tanh(ep + hp[:, None, :])                 # (TB, S, H)
    scores = jnp.sum(energy * v[None, :, :], axis=-1)      # (TB, S)  VPU mul + lane reduce
    o_ref[...] = _softmax_last(scores).astype(o_ref.dtype)


# ---------------- wrapper ----------------

def _pick_batch_tile(B, S, H, itemsize=4, vmem_budget=4 * 1024 * 1024):
    """Batch rows per grid step: whole batch if tiny, else a multiple of 8 that keeps the
    double-buffered encoder block within a conservative VMEM budget (v7x-safe) and leaves
    >= 2 grid steps so both v7x TensorCores get work."""
    if B <= 8:
        return B
    max_rows_vmem = max(8, vmem_budget // (2 * S * H * itemsize))
    half = max(8, (B // 2 // 8) * 8)
    tb = min(128, max_rows_vmem, half, B)
    return max(8, (tb // 8) * 8)


def attn_forward(method, params, hidden, encoder_outputs, *, batch_tile=None):
    """hidden: (1, B, H), encoder_outputs: (S, B, H) -> (B, 1, S) (torch conventions)."""
    S, B, H = encoder_outputs.shape
    dtype = hidden.dtype
    hid2d = hidden.reshape(B, H)                     # free reshape (drop leading singleton)

    if method not in ("dot", "general", "concat"):
        raise ValueError(method, "is not an appropriate attention method.")

    TB = batch_tile if batch_tile is not None else _pick_batch_tile(B, S, H)
    TB = min(TB, B)
    grid = (pl.cdiv(B, TB),)

    row_spec = pl.BlockSpec((TB, H), lambda i: (i, 0))
    enc_spec = pl.BlockSpec((S, TB, H), lambda i: (0, i, 0))   # index middle (batch) dim: no HBM transpose
    out_spec = pl.BlockSpec((TB, S), lambda i: (i, 0))         # lane-dense 2-D output block
    out_shape = jax.ShapeDtypeStruct((B, S), dtype)
    cparams = pltpu.CompilerParams(dimension_semantics=("parallel",))

    if method in ("dot", "general"):
        if method == "dot":
            q = hid2d
        else:
            # score[b,s] = enc[s,b,:] . (hid[b,:] @ W); hid.bias is constant over s and
            # cancels in the softmax -> dropped. This removes the (S,H)@(H,H) energy matmul.
            q = hid2d.astype(jnp.float32) @ params["attn_w"].astype(jnp.float32)
        out2d = pl.pallas_call(
            _dot_general_kernel,
            grid=grid,
            in_specs=[row_spec, enc_spec],
            out_specs=out_spec,
            out_shape=out_shape,
            compiler_params=cparams,
        )(q, encoder_outputs)
    else:  # concat
        w = params["attn_w"].astype(jnp.float32)              # (H, 2H) torch Linear weight (out, in)
        bias = params["attn_b"].astype(jnp.float32)           # (H,)
        v = params["v"].astype(jnp.float32).reshape(1, H)     # (1, H)
        # Split W once in the wrapper (clean resident blocks, no per-step slicing) and fold
        # the hidden projection + bias, which are constant over the sequence.
        hid_part = hid2d.astype(jnp.float32) @ w[:, :H].T + bias   # (B, H)
        w_e_t = w[:, H:].T                                         # (H_in, H_out), pre-transposed
        out2d = pl.pallas_call(
            _concat_kernel,
            grid=grid,
            in_specs=[
                row_spec,                                   # hid_part
                enc_spec,                                   # encoder_outputs (S, B, H)
                pl.BlockSpec((H, H), lambda i: (0, 0)),     # w_e_t, resident across grid
                pl.BlockSpec((1, H), lambda i: (0, 0)),     # v, resident across grid
            ],
            out_specs=out_spec,
            out_shape=out_shape,
            compiler_params=cparams,
        )(hid_part, encoder_outputs, w_e_t, v)

    return out2d.reshape(B, 1, S)                    # free reshape to torch output layout


# ---------------- pure-JAX reference (mirrors the torch forward) ----------------

def attn_reference(method, params, hidden, encoder_outputs):
    if method == "dot":
        energies = jnp.sum(hidden * encoder_outputs, axis=2)                     # (S, B)
    elif method == "general":
        energy = encoder_outputs @ params["attn_w"].T + params["attn_b"]
        energies = jnp.sum(hidden * energy, axis=2)
    elif method == "concat":
        hid_exp = jnp.broadcast_to(hidden, encoder_outputs.shape)
        cat = jnp.concatenate([hid_exp, encoder_outputs], axis=2)
        energy = jnp.tanh(cat @ params["attn_w"].T + params["attn_b"])
        energies = jnp.sum(params["v"] * energy, axis=2)
    energies = energies.T                                                        # (B, S)
    return jax.nn.softmax(energies, axis=1)[:, None, :]                          # (B, 1, S)


if __name__ == "__main__":
    B, S, H = 4, 16, 32
    key = jax.random.PRNGKey(0)
    k_hid, k_enc, kw1, kb1, kw2, kb2, kv = jax.random.split(key, 7)

    hidden = jax.random.normal(k_hid, (1, B, H), dtype=jnp.float32)
    encoder_outputs = jax.random.normal(k_enc, (S, B, H), dtype=jnp.float32)

    # deterministic "Linear-like" param init (uniform +/- 1/sqrt(fan_in))
    params = {
        "general": {
            "attn_w": jax.random.uniform(kw1, (H, H), jnp.float32, -1.0, 1.0) / jnp.sqrt(H),
            "attn_b": jax.random.uniform(kb1, (H,), jnp.float32, -1.0, 1.0) / jnp.sqrt(H),
        },
        "concat": {
            "attn_w": jax.random.uniform(kw2, (H, 2 * H), jnp.float32, -1.0, 1.0) / jnp.sqrt(2 * H),
            "attn_b": jax.random.uniform(kb2, (H,), jnp.float32, -1.0, 1.0) / jnp.sqrt(2 * H),
            "v": jax.random.normal(kv, (H,), dtype=jnp.float32),
        },
        "dot": {},
    }

    ok = True
    for method in ["dot", "general", "concat"]:
        out = attn_forward(method, params[method], hidden, encoder_outputs)
        out = jax.block_until_ready(out)
        ref = attn_reference(method, params[method], hidden, encoder_outputs)
        assert out.shape == (B, 1, S), (method, out.shape)
        if not jnp.allclose(out, ref, atol=1e-5, rtol=1e-5):
            ok = False
            print(f"MISMATCH in method={method}")

    if ok:
        print("KERNEL_OK")
</pallas_src>

<mosaic_0001>
module attributes {stable_mosaic.version = 11 : i64} {
  func.func @_dot_general_kernel(%arg0: i32, %arg1: memref<4x32xf32, #tpu.memory_space<vmem>>, %arg2: memref<16x4x32xf32, #tpu.memory_space<vmem>>, %arg3: memref<4x16xf32, #tpu.memory_space<vmem>>) attributes {dimension_semantics = [#tpu.dimension_semantics<parallel>], iteration_bounds = array<i64: 1>, scalar_prefetch = 0 : i64, scratch_operands = 0 : i64, tpu.core_type = #tpu.core_type<tc>, window_params = [{transform_indices = @transform_0, window_bounds = array<i64: 4, 32>}, {transform_indices = @transform_1, window_bounds = array<i64: 16, 4, 32>}, {transform_indices = @transform_2, window_bounds = array<i64: 4, 16>}]} {
    %c0 = arith.constant 0 : index
    %c0_0 = arith.constant 0 : index
    %c0_1 = arith.constant 0 : index
    %0 = vector.load %arg2[%c0, %c0_0, %c0_1] : memref<16x4x32xf32, #tpu.memory_space<vmem>>, vector<16x4x32xf32>
    %1 = tpu.transpose %0, [1, 0, 2] : vector<16x4x32xf32> -> vector<4x16x32xf32>
    %c0_2 = arith.constant 0 : index
    %c0_3 = arith.constant 0 : index
    %2 = vector.load %arg1[%c0_2, %c0_3] : memref<4x32xf32, #tpu.memory_space<vmem>>, vector<4x32xf32>
    %3 = vector.shape_cast %2 : vector<4x32xf32> to vector<4x1x32xf32>
    %4 = vector.broadcast %3 : vector<4x1x32xf32> to vector<4x16x32xf32>
    %5 = arith.mulf %1, %4 : vector<4x16x32xf32>
    %cst = arith.constant dense<0.000000e+00> : vector<4x16xf32>
    %6 = vector.multi_reduction <add>, %5, %cst [2] : vector<4x16x32xf32> to vector<4x16xf32>
    %cst_4 = arith.constant dense<0xFF800000> : vector<4xf32>
    %7 = vector.multi_reduction <maximumf>, %6, %cst_4 [1] : vector<4x16xf32> to vector<4xf32>
    %8 = vector.shape_cast %7 : vector<4xf32> to vector<4x1xf32>
    %9 = vector.broadcast %8 : vector<4x1xf32> to vector<4x16xf32>
    %10 = arith.subf %6, %9 : vector<4x16xf32>
    %11 = math.exp %10 : vector<4x16xf32>
    %cst_5 = arith.constant dense<0.000000e+00> : vector<4xf32>
    %12 = vector.multi_reduction <add>, %11, %cst_5 [1] : vector<4x16xf32> to vector<4xf32>
    %13 = vector.shape_cast %12 : vector<4xf32> to vector<4x1xf32>
    %14 = vector.broadcast %13 : vector<4x1xf32> to vector<4x16xf32>
    %15 = arith.divf %11, %14 : vector<4x16xf32>
    %c0_6 = arith.constant 0 : index
    %c0_7 = arith.constant 0 : index
    %16 = vector.load %arg3[%c0_6, %c0_7] : memref<4x16xf32, #tpu.memory_space<vmem>>, vector<4x16xf32>
    tpu.vector_store %arg3[%c0_6, %c0_7], %15 {strides = array<i32>} : memref<4x16xf32, #tpu.memory_space<vmem>>, vector<4x16xf32>,
    return
  }
  func.func @transform_0(%arg0: i32) -> (i32, i32) {
    %c0_i32 = arith.constant 0 : i32
    %c0_i32_0 = arith.constant 0 : i32
    return %arg0, %c0_i32 : i32, i32
  }
  func.func @transform_1(%arg0: i32) -> (i32, i32, i32) {
    %c0_i32 = arith.constant 0 : i32
    %c0_i32_0 = arith.constant 0 : i32
    %c0_i32_1 = arith.constant 0 : i32
    return %c0_i32, %arg0, %c0_i32_0 : i32, i32, i32
  }
  func.func @transform_2(%arg0: i32) -> (i32, i32) {
    %c0_i32 = arith.constant 0 : i32
    %c0_i32_0 = arith.constant 0 : i32
    return %arg0, %c0_i32 : i32, i32
  }
}

</mosaic_0001>

<llo_original>
// kernel: tpu_custom_call.1
$region0: #{tpu_custom_call.1}
  #allocation0 [shape = 'u32[]', space=smem, size = 0x4, offset = 0x4, fixed_abs, tag = 'smem constant byte address 0x4 - core index']
  #allocation1 [shape = 'u32[144,128]{1,0:T(1,128)}', space=vmem, size = 0x12000, scoped, tag = 'internal scratch']
  %s0 = inlined_call_operand.hbm [shape: f32[4,32], index: 0, kind: input, shape index: {}]
  %s1 = inlined_call_operand.hbm [shape: f32[16,4,32], index: 1, kind: input, shape index: {}]
  %s2 = inlined_call_operand.hbm [shape: f32[4,16], index: 2, kind: output, shape index: {}]
  %s3 = sld [smem:[#allocation0]]
  $region26: #{tpu_custom_call.1} parent=0
    _
  %s5 = ssub.s32 1, %s3
  %s6 = scalar_select 0, %s5, %s3
  $region1: #{tpu_custom_call.1} parent=0
    #allocation2 [shape = 'u8[2048]{0}', space=vmem, size = 0x800, scoped, tag = 'input window, operand 0, single buffered']
    #allocation3 [shape = 's32[1]{0}', space=sflag, size = 0x4, scoped, tag = 'scoped memory for tpu_custom_call.1']
    #allocation4 [shape = 's32[1]{0}', space=sflag, size = 0x4, scoped, tag = 'scoped memory for tpu_custom_call.1']
    #allocation5 [shape = 'u8[32768]{0}', space=vmem, size = 0x8000, scoped, tag = 'input window, operand 1, single buffered']
    #allocation6 [shape = 's32[1]{0}', space=sflag, size = 0x4, scoped, tag = 'scoped memory for tpu_custom_call.1']
    #allocation7 [shape = 'u8[2048]{0}', space=vmem, size = 0x800, scoped, tag = 'output window, operand 0, single buffered']
    %7 = vsyncpa [#allocation3], 0
    %8 = vsyncpa [#allocation6], 0
    %9 = vsyncpa [#allocation4], 0
    // Predicated region
    $region2: #{tpu_custom_call.1} parent=1 // pred_check
      _
    $region3: #{tpu_custom_call.1} parent=1 // pred_check_branch
      %11 = sbr.rel (0) target = $region5
    $region4: #{tpu_custom_call.1} parent=1 // pred_region
      %s13 = ssub.s32 64, 64
      %14 = vsyncadd [#allocation3], %s13
      %s16 = sshll.u32 [#allocation2], 4
      %s17 = int_to_ptr.vmem [resolvable:$true] %s16
      %19 = dma.hbm_to_vmem [thread:$0]  %s0, 64, %s17, [#allocation3]
    $region5: #{tpu_custom_call.1} parent=1 // pred_fallthru
      _
    // Predicated region
    $region6: #{tpu_custom_call.1} parent=1 // pred_check
      _
    $region7: #{tpu_custom_call.1} parent=1 // pred_check_branch
      %21 = sbr.rel (0) target = $region9
    $region8: #{tpu_custom_call.1} parent=1 // pred_region
      %s23 = ssub.s32 1024, 1024
      %24 = vsyncadd [#allocation6], %s23
      %s25 = sshll.u32 [#allocation5], 4
      %s26 = int_to_ptr.vmem [resolvable:$true] %s25
      %31 = dma.hbm_to_vmem [thread:$0]  %s1, 1024, %s26, [#allocation6], 64, 64, 4
    $region9: #{tpu_custom_call.1} parent=1 // pred_fallthru
      _
    // Predicated region
    $region10: #{tpu_custom_call.1} parent=1 // pred_check
      _
    $region11: #{tpu_custom_call.1} parent=1 // pred_check_branch
      %33 = sbr.rel (0) target = $region13
    $region12: #{tpu_custom_call.1} parent=1 // pred_region
      %34 = dma.done [#allocation3], 64
    $region13: #{tpu_custom_call.1} parent=1 // pred_fallthru
      _
    // Predicated region
    $region14: #{tpu_custom_call.1} parent=1 // pred_check
      _
    $region15: #{tpu_custom_call.1} parent=1 // pred_check_branch
      %36 = sbr.rel (0) target = $region17
    $region16: #{tpu_custom_call.1} parent=1 // pred_region
      %37 = dma.done [#allocation6], 1024
    $region17: #{tpu_custom_call.1} parent=1 // pred_fallthru
      _
    %v38 = vld [vmem:[#allocation5] sm:$0xf]
    %v39 = vld [vmem:[#allocation5 + $0x4] sm:$0xf]
    %v40 = vld [vmem:[#allocation5 + $0x8] sm:$0xf]
    %v41 = vld [vmem:[#allocation5 + $0xc] sm:$0xf]
    %v42 = vld [vmem:[#allocation5 + $0x10] sm:$0xf]
    %v43 = vld [vmem:[#allocation5 + $0x14] sm:$0xf]
    %v44 = vld [vmem:[#allocation5 + $0x18] sm:$0xf]
    %v45 = vld [vmem:[#allocation5 + $0x1c] sm:$0xf]
    %v46 = vld [vmem:[#allocation5 + $0x20] sm:$0xf]
    %v47 = vld [vmem:[#allocation5 + $0x24] sm:$0xf]
    %v48 = vld [vmem:[#allocation5 + $0x28] sm:$0xf]
    %v49 = vld [vmem:[#allocation5 + $0x2c] sm:$0xf]
    %v50 = vld [vmem:[#allocation5 + $0x30] sm:$0xf]
    %v51 = vld [vmem:[#allocation5 + $0x34] sm:$0xf]
    %v52 = vld [vmem:[#allocation5 + $0x38] sm:$0xf]
    %v53 = vld [vmem:[#allocation5 + $0x3c] sm:$0xf]
    %v54 = vcombine.low %v38, %v40
    %v56 = vunpack.c.l.s4 1983009808
    %v57 = vunpack.c.0.s8 %v56
    %v58 = vlaneseq
    %v59 = vshrl.u32 %v58, 7
    %v60 = vsub.s32 %v57, %v59
    %v61 = vrot.slane %v54, %v60
    %v62 = vcombine.low %v39, %v41
    %v64 = vunpack.c.l.s4 1983009808
    %v65 = vunpack.c.0.s8 %v64
    %v66 = vlaneseq
    %v67 = vshrl.u32 %v66, 7
    %v68 = vsub.s32 %v65, %v67
    %v69 = vrot.slane %v62, %v68
    %v70 = vcombine.low %v42, %v44
    %v72 = vunpack.c.l.s4 1983009808
    %v73 = vunpack.c.0.s8 %v72
    %v74 = vlaneseq
    %v75 = vshrl.u32 %v74, 7
    %v76 = vsub.s32 %v73, %v75
    %v77 = vrot.slane %v70, %v76
    %v78 = vcombine.low %v43, %v45
    %v80 = vunpack.c.l.s4 1983009808
    %v81 = vunpack.c.0.s8 %v80
    %v82 = vlaneseq
    %v83 = vshrl.u32 %v82, 7
    %v84 = vsub.s32 %v81, %v83
    %v85 = vrot.slane %v78, %v84
    %v86 = vcombine.low %v61, %v69
    %v87 = vcombine.high %v61, %v69
    %v89 = vunpack.c.l.s4 1934713408
    %v90 = vunpack.c.0.s8 %v89
    %v91 = vlaneseq
    %v92 = vshrl.u32 %v91, 7
    %v93 = vsub.s32 %v90, %v92
    %v94 = vrot.slane %v86, %v93
    %v96 = vunpack.c.l.s4 1934713408
    %v97 = vunpack.c.0.s8 %v96
    %v98 = vlaneseq
    %v99 = vshrl.u32 %v98, 7
    %v100 = vsub.s32 %v97, %v99
    %v101 = vrot.slane %v87, %v100
    %v102 = vcombine.low %v77, %v85
    %v103 = vcombine.high %v77, %v85
    %v105 = vunpack.c.l.s4 1934713408
    %v106 = vunpack.c.0.s8 %v105
    %v107 = vlaneseq
    %v108 = vshrl.u32 %v107, 7
    %v109 = vsub.s32 %v106, %v108
    %v110 = vrot.slane %v102, %v109
    %v112 = vunpack.c.l.s4 1934713408
    %v113 = vunpack.c.0.s8 %v112
    %v114 = vlaneseq
    %v115 = vshrl.u32 %v114, 7
    %v116 = vsub.s32 %v113, %v115
    %v117 = vrot.slane %v103, %v116
    %v118 = vcombine.low %v94, %v110
    %v119 = vcombine.high %v94, %v110
    %v120 = vcombine.low %v101, %v117
    %v121 = vcombine.high %v101, %v117
    %v122 = vcombine.low %v46, %v48
    %v124 = vunpack.c.l.s4 1983009808
    %v125 = vunpack.c.0.s8 %v124
    %v126 = vlaneseq
    %v127 = vshrl.u32 %v126, 7
    %v128 = vsub.s32 %v125, %v127
    %v129 = vrot.slane %v122, %v128
    %v130 = vcombine.low %v47, %v49
    %v132 = vunpack.c.l.s4 1983009808
    %v133 = vunpack.c.0.s8 %v132
    %v134 = vlaneseq
    %v135 = vshrl.u32 %v134, 7
    %v136 = vsub.s32 %v133, %v135
    %v137 = vrot.slane %v130, %v136
    %v138 = vcombine.low %v50, %v52
    %v140 = vunpack.c.l.s4 1983009808
    %v141 = vunpack.c.0.s8 %v140
    %v142 = vlaneseq
    %v143 = vshrl.u32 %v142, 7
    %v144 = vsub.s32 %v141, %v143
    %v145 = vrot.slane %v138, %v144
    %v146 = vcombine.low %v51, %v53
    %v148 = vunpack.c.l.s4 1983009808
    %v149 = vunpack.c.0.s8 %v148
    %v150 = vlaneseq
    %v151 = vshrl.u32 %v150, 7
    %v152 = vsub.s32 %v149, %v151
    %v153 = vrot.slane %v146, %v152
    %v154 = vcombine.low %v129, %v137
    %v155 = vcombine.high %v129, %v137
    %v157 = vunpack.c.l.s4 1934713408
    %v158 = vunpack.c.0.s8 %v157
    %v159 = vlaneseq
    %v160 = vshrl.u32 %v159, 7
    %v161 = vsub.s32 %v158, %v160
    %v162 = vrot.slane %v154, %v161
    %v164 = vunpack.c.l.s4 1934713408
    %v165 = vunpack.c.0.s8 %v164
    %v166 = vlaneseq
    %v167 = vshrl.u32 %v166, 7
    %v168 = vsub.s32 %v165, %v167
    %v169 = vrot.slane %v155, %v168
    %v170 = vcombine.low %v145, %v153
    %v171 = vcombine.high %v145, %v153
    %v173 = vunpack.c.l.s4 1934713408
    %v174 = vunpack.c.0.s8 %v173
    %v175 = vlaneseq
    %v176 = vshrl.u32 %v175, 7
    %v177 = vsub.s32 %v174, %v176
    %v178 = vrot.slane %v170, %v177
    %v180 = vunpack.c.l.s4 1934713408
    %v181 = vunpack.c.0.s8 %v180
    %v182 = vlaneseq
    %v183 = vshrl.u32 %v182, 7
    %v184 = vsub.s32 %v181, %v183
    %v185 = vrot.slane %v171, %v184
    %v186 = vcombine.low %v162, %v178
    %v187 = vcombine.high %v162, %v178
    %v188 = vcombine.low %v169, %v185
    %v189 = vcombine.high %v169, %v185
    %v190 = vld [vmem:[#allocation2] sm:$0xf]
    %v193 = vunpack.c.l.s4 1966171168
    %v194 = vunpack.c.0.s8 %v193
    %v195 = vlaneseq
    %v196 = vshrl.u32 %v195, 7
    %v197 = vsub.s32 %v194, %v196
    %v198 = vrot.slane %v190, %v197
    %v199 = vcombine.high %v198, %v198
    %v201 = vunpack.c.l.s4 1966171168
    %v202 = vunpack.c.0.s8 %v201
    %v203 = vlaneseq
    %v204 = vshrl.u32 %v203, 7
    %v205 = vsub.s32 %v202, %v204
    %v206 = vrot.slane %v198, %v205
    %v208 = vunpack.c.l.s4 1966171168
    %v209 = vunpack.c.0.s8 %v208
    %v210 = vlaneseq
    %v211 = vshrl.u32 %v210, 7
    %v212 = vsub.s32 %v209, %v211
    %v213 = vrot.slane %v199, %v212
    %v214 = vcombine.high %v206, %v206
    %v215 = vcombine.high %v213, %v213
    %v216 = vlaneseq
    %v217 = vshrl.u32 %v216, 7
    %v218 = vsub.s32 0, %v217
    %v219 = vrot.slane %v206, %v218
    %v220 = vlaneseq
    %v221 = vshrl.u32 %v220, 7
    %v222 = vsub.s32 0, %v221
    %v223 = vrot.slane %v213, %v222
    %v224 = vlaneseq
    %v225 = vshrl.u32 %v224, 7
    %v226 = vsub.s32 0, %v225
    %v227 = vrot.slane %v214, %v226
    %v228 = vlaneseq
    %v229 = vshrl.u32 %v228, 7
    %v230 = vsub.s32 0, %v229
    %v231 = vrot.slane %v215, %v230
    %v236 = vmul.f32 %v118, %v219
    %v237 = vmul.f32 %v186, %v219
    %v238 = vmul.f32 %v119, %v223
    %v239 = vmul.f32 %v187, %v223
    %v240 = vmul.f32 %v120, %v227
    %v241 = vmul.f32 %v188, %v227
    %v242 = vmul.f32 %v121, %v231
    %v243 = vmul.f32 %v189, %v231
    %vm244 = vcmask 261120
    %v245 = vsel %vm244, %v236, 0.0
    %246 = vadd.xlane.f32.xlu0 %v245
    %v247 = vpop.xlane.xlu0 %246
    %v248 = vsel %vm244, %v237, 0.0
    %249 = vadd.xlane.f32.xlu0 %v248
    %v250 = vpop.xlane.xlu0 %249
    %v251 = vsel %vm244, %v238, 0.0
    %252 = vadd.xlane.f32.xlu0 %v251
    %v253 = vpop.xlane.xlu0 %252
    %v254 = vsel %vm244, %v239, 0.0
    %255 = vadd.xlane.f32.xlu0 %v254
    %v256 = vpop.xlane.xlu0 %255
    %v257 = vsel %vm244, %v240, 0.0
    %258 = vadd.xlane.f32.xlu0 %v257
    %v259 = vpop.xlane.xlu0 %258
    %v260 = vsel %vm244, %v241, 0.0
    %261 = vadd.xlane.f32.xlu0 %v260
    %v262 = vpop.xlane.xlu0 %261
    %v263 = vsel %vm244, %v242, 0.0
    %264 = vadd.xlane.f32.xlu0 %v263
    %v265 = vpop.xlane.xlu0 %264
    %v266 = vsel %vm244, %v243, 0.0
    %267 = vadd.xlane.f32.xlu0 %v266
    %v268 = vpop.xlane.xlu0 %267
    %v277 = vlaneseq
    %v278 = vand.u32 %v277, 127
    %v279 = vlaneseq
    %v280 = vshrl.u32 %v279, 7
    %v281 = vsub.s32 %v278, %v280
    %v282 = vrot.slane %v247, %v281
    %v283 = vadd.s32 %v278, 4294967288
    %v284 = vlaneseq
    %v285 = vshrl.u32 %v284, 7
    %v286 = vsub.s32 %v283, %v285
    %v287 = vrot.slane %v250, %v286
    %vm288 = vcmask 130112
    %v289 = vsel %vm288, %v287, %v282
    %v290 = vlaneseq
    %v291 = vshrl.u32 %v290, 7
    %v292 = vsub.s32 %v278, %v291
    %v293 = vrot.slane %v253, %v292
    %v294 = vlaneseq
    %v295 = vshrl.u32 %v294, 7
    %v296 = vsub.s32 %v283, %v295
    %v297 = vrot.slane %v256, %v296
    %v298 = vsel %vm288, %v297, %v293
    %v299 = vlaneseq
    %v300 = vshrl.u32 %v299, 7
    %v301 = vsub.s32 %v278, %v300
    %v302 = vrot.slane %v259, %v301
    %v303 = vlaneseq
    %v304 = vshrl.u32 %v303, 7
    %v305 = vsub.s32 %v283, %v304
    %v306 = vrot.slane %v262, %v305
    %v307 = vsel %vm288, %v306, %v302
    %v308 = vlaneseq
    %v309 = vshrl.u32 %v308, 7
    %v310 = vsub.s32 %v278, %v309
    %v311 = vrot.slane %v265, %v310
    %v312 = vlaneseq
    %v313 = vshrl.u32 %v312, 7
    %v314 = vsub.s32 %v283, %v313
    %v315 = vrot.slane %v268, %v314
    %v316 = vsel %vm288, %v315, %v311
    %vm317 = vcmask 1041409
    %v318 = vsel %vm317, %v298, %v289
    %vm319 = vcmask 1042434
    %v320 = vsel %vm319, %v307, %v318
    %vm321 = vcmask 1043459
    %v322 = vsel %vm321, %v316, %v320
    %vm324 = vcmask 125952
    %v325 = vsel %vm324, %v322, -inf
    %326 = vmax.xlane.f32.xlu0 %v325
    %v327 = vpop.xlane.xlu0 %326
    %v329 = vlaneseq
    %v330 = vshrl.u32 %v329, 7
    %v331 = vsub.s32 0, %v330
    %v332 = vrot.slane %v327, %v331
    %v333 = vlaneseq
    %v334 = vshrl.u32 %v333, 7
    %v335 = vsub.s32 1, %v334
    %v336 = vrot.slane %v327, %v335
    %v337 = vlaneseq
    %v338 = vshrl.u32 %v337, 7
    %v339 = vsub.s32 2, %v338
    %v340 = vrot.slane %v327, %v339
    %v341 = vlaneseq
    %v342 = vshrl.u32 %v341, 7
    %v343 = vsub.s32 3, %v342
    %v344 = vrot.slane %v327, %v343
    %v349 = vsub.f32 %v247, %v332
    %v350 = vsub.f32 %v250, %v332
    %v351 = vsub.f32 %v253, %v336
    %v352 = vsub.f32 %v256, %v336
    %v353 = vsub.f32 %v259, %v340
    %v354 = vsub.f32 %v262, %v340
    %v355 = vsub.f32 %v265, %v344
    %v356 = vsub.f32 %v268, %v344
    %v357 = vmul.f32 %v349, 1.442695
    %v358 = vpow.pop %v357
    %v359 = vmul.f32 %v350, 1.442695
    %v360 = vpow.pop %v359
    %v361 = vmul.f32 %v351, 1.442695
    %v362 = vpow.pop %v361
    %v363 = vmul.f32 %v352, 1.442695
    %v364 = vpow.pop %v363
    %v365 = vmul.f32 %v353, 1.442695
    %v366 = vpow.pop %v365
    %v367 = vmul.f32 %v354, 1.442695
    %v368 = vpow.pop %v367
    %v369 = vmul.f32 %v355, 1.442695
    %v370 = vpow.pop %v369
    %v371 = vmul.f32 %v356, 1.442695
    %v372 = vpow.pop %v371
    %381 = vset.pattern.permute.xlu0 0
    %382 = vperm.xlu0 %381, %v358
    %v383 = vpop.permute.xlu0 %382
    %384 = vset.pattern.permute.xlu0 0
    %385 = vperm.xlu0 %384, %v360
    %v386 = vpop.permute.xlu0 %385
    %387 = vset.pattern.permute.xlu0 0
    %388 = vperm.xlu0 %387, %v362
    %v389 = vpop.permute.xlu0 %388
    %390 = vset.pattern.permute.xlu0 0
    %391 = vperm.xlu0 %390, %v364
    %v392 = vpop.permute.xlu0 %391
    %393 = vset.pattern.permute.xlu0 0
    %394 = vperm.xlu0 %393, %v366
    %v395 = vpop.permute.xlu0 %394
    %396 = vset.pattern.permute.xlu0 0
    %397 = vperm.xlu0 %396, %v368
    %v398 = vpop.permute.xlu0 %397
    %399 = vset.pattern.permute.xlu0 0
    %400 = vperm.xlu0 %399, %v370
    %v401 = vpop.permute.xlu0 %400
    %402 = vset.pattern.permute.xlu0 0
    %403 = vperm.xlu0 %402, %v372
    %v404 = vpop.permute.xlu0 %403
    %v405 = vlaneseq
    %v406 = vshrl.u32 %v405, 7
    %v407 = vsub.s32 %v278, %v406
    %v408 = vrot.slane %v383, %v407
    %v409 = vlaneseq
    %v410 = vshrl.u32 %v409, 7
    %v411 = vsub.s32 %v283, %v410
    %v412 = vrot.slane %v386, %v411
    %v413 = vsel %vm288, %v412, %v408
    %v414 = vlaneseq
    %v415 = vshrl.u32 %v414, 7
    %v416 = vsub.s32 %v278, %v415
    %v417 = vrot.slane %v389, %v416
    %v418 = vlaneseq
    %v419 = vshrl.u32 %v418, 7
    %v420 = vsub.s32 %v283, %v419
    %v421 = vrot.slane %v392, %v420
    %v422 = vsel %vm288, %v421, %v417
    %v423 = vlaneseq
    %v424 = vshrl.u32 %v423, 7
    %v425 = vsub.s32 %v278, %v424
    %v426 = vrot.slane %v395, %v425
    %v427 = vlaneseq
    %v428 = vshrl.u32 %v427, 7
    %v429 = vsub.s32 %v283, %v428
    %v430 = vrot.slane %v398, %v429
    %v431 = vsel %vm288, %v430, %v426
    %v432 = vlaneseq
    %v433 = vshrl.u32 %v432, 7
    %v434 = vsub.s32 %v278, %v433
    %v435 = vrot.slane %v401, %v434
    %v436 = vlaneseq
    %v437 = vshrl.u32 %v436, 7
    %v438 = vsub.s32 %v283, %v437
    %v439 = vrot.slane %v404, %v438
    %v440 = vsel %vm288, %v439, %v435
    %v441 = vsel %vm317, %v422, %v413
    %v442 = vsel %vm319, %v431, %v441
    %v443 = vsel %vm321, %v440, %v442
    %v445 = vsel %vm324, %v443, 0.0
    %446 = vadd.xlane.f32.xlu0 %v445
    %v447 = vpop.xlane.xlu0 %446
    %v449 = vlaneseq
    %v450 = vshrl.u32 %v449, 7
    %v451 = vsub.s32 0, %v450
    %v452 = vrot.slane %v447, %v451
    %v453 = vlaneseq
    %v454 = vshrl.u32 %v453, 7
    %v455 = vsub.s32 1, %v454
    %v456 = vrot.slane %v447, %v455
    %v457 = vlaneseq
    %v458 = vshrl.u32 %v457, 7
    %v459 = vsub.s32 2, %v458
    %v460 = vrot.slane %v447, %v459
    %v461 = vlaneseq
    %v462 = vshrl.u32 %v461, 7
    %v463 = vsub.s32 3, %v462
    %v464 = vrot.slane %v447, %v463
    %v469 = vrcp.pop %v452
    %v470 = vmul.f32 %v358, %v469
    %v471 = vmul.f32 %v360, %v469
    %v472 = vrcp.pop %v456
    %v473 = vmul.f32 %v362, %v472
    %v474 = vmul.f32 %v364, %v472
    %v475 = vrcp.pop %v460
    %v476 = vmul.f32 %v366, %v475
    %v477 = vmul.f32 %v368, %v475
    %v478 = vrcp.pop %v464
    %v479 = vmul.f32 %v370, %v478
    %v480 = vmul.f32 %v372, %v478
    %489 = vset.pattern.permute.xlu0 0
    %490 = vperm.xlu0 %489, %v470
    %v491 = vpop.permute.xlu0 %490
    %492 = vset.pattern.permute.xlu0 0
    %493 = vperm.xlu0 %492, %v471
    %v494 = vpop.permute.xlu0 %493
    %495 = vset.pattern.permute.xlu0 0
    %496 = vperm.xlu0 %495, %v473
    %v497 = vpop.permute.xlu0 %496
    %498 = vset.pattern.permute.xlu0 0
    %499 = vperm.xlu0 %498, %v474
    %v500 = vpop.permute.xlu0 %499
    %501 = vset.pattern.permute.xlu0 0
    %502 = vperm.xlu0 %501, %v476
    %v503 = vpop.permute.xlu0 %502
    %504 = vset.pattern.permute.xlu0 0
    %505 = vperm.xlu0 %504, %v477
    %v506 = vpop.permute.xlu0 %505
    %507 = vset.pattern.permute.xlu0 0
    %508 = vperm.xlu0 %507, %v479
    %v509 = vpop.permute.xlu0 %508
    %510 = vset.pattern.permute.xlu0 0
    %511 = vperm.xlu0 %510, %v480
    %v512 = vpop.permute.xlu0 %511
    %v513 = vlaneseq
    %v514 = vshrl.u32 %v513, 7
    %v515 = vsub.s32 %v278, %v514
    %v516 = vrot.slane %v491, %v515
    %v517 = vlaneseq
    %v518 = vshrl.u32 %v517, 7
    %v519 = vsub.s32 %v283, %v518
    %v520 = vrot.slane %v494, %v519
    %v521 = vsel %vm288, %v520, %v516
    %v522 = vlaneseq
    %v523 = vshrl.u32 %v522, 7
    %v524 = vsub.s32 %v278, %v523
    %v525 = vrot.slane %v497, %v524
    %v526 = vlaneseq
    %v527 = vshrl.u32 %v526, 7
    %v528 = vsub.s32 %v283, %v527
    %v529 = vrot.slane %v500, %v528
    %v530 = vsel %vm288, %v529, %v525
    %v531 = vlaneseq
    %v532 = vshrl.u32 %v531, 7
    %v533 = vsub.s32 %v278, %v532
    %v534 = vrot.slane %v503, %v533
    %v535 = vlaneseq
    %v536 = vshrl.u32 %v535, 7
    %v537 = vsub.s32 %v283, %v536
    %v538 = vrot.slane %v506, %v537
    %v539 = vsel %vm288, %v538, %v534
    %v540 = vlaneseq
    %v541 = vshrl.u32 %v540, 7
    %v542 = vsub.s32 %v278, %v541
    %v543 = vrot.slane %v509, %v542
    %v544 = vlaneseq
    %v545 = vshrl.u32 %v544, 7
    %v546 = vsub.s32 %v283, %v545
    %v547 = vrot.slane %v512, %v546
    %v548 = vsel %vm288, %v547, %v543
    %v549 = vsel %vm317, %v530, %v521
    %v550 = vsel %vm319, %v539, %v549
    %v551 = vsel %vm321, %v548, %v550
    %553 = vst.msk [vmem:[#allocation7] sm:$0xf] %vm324, %v551
    // Predicated region
    $region18: #{tpu_custom_call.1} parent=1 // pred_check
      _
    $region19: #{tpu_custom_call.1} parent=1 // pred_check_branch
      %555 = sbr.rel (0) target = $region21
    $region20: #{tpu_custom_call.1} parent=1 // pred_region
      %s557 = ssub.s32 64, 64
      %558 = vsyncadd [#allocation4], %s557
      %s560 = sshll.u32 [#allocation7], 4
      %s561 = int_to_ptr.vmem [resolvable:$true] %s560
      %563 = dma.vmem_to_hbm [thread:$0]  %s561, 64, %s2, [#allocation4]
    $region21: #{tpu_custom_call.1} parent=1 // pred_fallthru
      _
    // Predicated region
    $region22: #{tpu_custom_call.1} parent=1 // pred_check
      _
    $region23: #{tpu_custom_call.1} parent=1 // pred_check_branch
      %565 = sbr.rel (0) target = $region25
    $region24: #{tpu_custom_call.1} parent=1 // pred_region
      %566 = dma.done [#allocation4], 64
    $region25: #{tpu_custom_call.1} parent=1 // pred_fallthru
      _
    %567 = vsyncpa [#allocation3], 1
    %568 = vsyncpa [#allocation6], 1
    %569 = vsyncpa [#allocation4], 1

</llo_original>
